<compile_context>
chip_gen: v7x
topology: tpu7x:2x2x1
jax: 0.10.0
libtpu: 0.0.40
codegen_flags: <defaults>
</compile_context>

<pallas_src>
import jax
import jax.numpy as jnp
from jax.experimental import pallas as pl
from jax.experimental.pallas import tpu as pltpu

IN_H, IN_W, OUT_N = 8, 10, 6
K = IN_H * IN_W  # 80


def _fclayer_kernel(x_ref, w_ref, b_ref, o_ref):
    # x_ref: (TB, out_n, k)   batch tile; k on lanes, out_n on sublanes
    # w_ref: (out_n, k)       resident (constant index_map)
    # b_ref: (1, out_n)       resident
    # o_ref: (TB, out_n)
    x = x_ref[...].astype(jnp.float32)           # f32 accumulation in-kernel
    w = w_ref[...].astype(jnp.float32)
    prod = x * w[None, :, :]                     # VALU; leading-dim broadcast reuses resident w vregs
    red = jnp.sum(prod, axis=-1)                 # XLU lane reduction over k -> (TB, out_n)
    out = red + b_ref[...].astype(jnp.float32)   # bias broadcast over rows
    o_ref[...] = out.astype(o_ref.dtype)


def _round_up(x, m):
    return ((x + m - 1) // m) * m


def _choose_tb(batch, block_b):
    """Batch tile: multiple of 8 (output sublane rule) unless one block covers
    the whole batch; split small-but-nontrivial batches into >=2 grid steps so
    v7x's two TensorCores both get work."""
    block_b = max(8, (block_b // 8) * 8)
    if batch > block_b:
        return block_b
    if batch >= 256:
        return _round_up(-(-batch // 2), 8)      # at least 2 grid steps
    return batch                                 # single block == full batch dim


def fclayer_forward(x, weight, bias, *, in_h=IN_H, in_w=IN_W, out_n=OUT_N,
                    block_b=2048):
    """Equivalent of fclayer.forward: x reshaped to (-1, out_n, in_h*in_w);
    group n gets its own Linear(in_h*in_w -> 1). Returns (B, out_n)."""
    k = in_h * in_w
    x3 = x.reshape(-1, out_n, k)                 # natural layout; no transpose, no pad
    B = x3.shape[0]
    out_dtype = jnp.result_type(x.dtype, weight.dtype, bias.dtype)

    w2 = weight.reshape(out_n, k)
    b2 = bias.reshape(1, out_n)

    tb = _choose_tb(B, block_b)
    grid_b = pl.cdiv(B, tb)

    # Explicit scoped-VMEM budget: double-buffered input block + in-kernel f32
    # temporaries + double-buffered output block, using padded (8,128) footprints.
    sub_pad = 8 * pl.cdiv(out_n, 8)
    lane_pad = 128 * pl.cdiv(k, 128)
    in_block = tb * sub_pad * lane_pad * jnp.dtype(x3.dtype).itemsize
    f32_tmp = tb * sub_pad * lane_pad * 4
    out_block = _round_up(tb, 8) * 128 * jnp.dtype(out_dtype).itemsize
    vmem_limit = 2 * in_block + 2 * f32_tmp + 2 * out_block + (4 << 20)
    vmem_limit = int(min(max(vmem_limit, 16 << 20), 56 << 20))

    x_spec_kwargs = {}
    if grid_b > 1 and tb < 1024:
        # small tiles only: deeper prefetch hides the fixed per-step DMA overhead
        x_spec_kwargs["pipeline_mode"] = pl.Buffered(3)

    out = pl.pallas_call(
        _fclayer_kernel,
        out_shape=jax.ShapeDtypeStruct((B, out_n), out_dtype),
        grid=(grid_b,),
        in_specs=[
            pl.BlockSpec((tb, out_n, k), lambda i: (i, 0, 0), **x_spec_kwargs),
            pl.BlockSpec((out_n, k), lambda i: (0, 0)),    # resident weight
            pl.BlockSpec((1, out_n), lambda i: (0, 0)),    # resident bias
        ],
        out_specs=pl.BlockSpec((tb, out_n), lambda i: (i, 0)),
        compiler_params=pltpu.CompilerParams(
            dimension_semantics=("parallel",),             # megacore sharding on v7x
            vmem_limit_bytes=vmem_limit),
    )(x3, w2, b2)

    return out


if __name__ == "__main__":
    key = jax.random.PRNGKey(0)
    kx, kw, kb = jax.random.split(key, 3)

    B = 4
    # input consistent with the module's reshape(-1, out_n, in_h, in_w)
    x = jax.random.normal(kx, (B, OUT_N, IN_H, IN_W), dtype=jnp.float32)

    # deterministic parameter init (mimics nn.Linear uniform(-1/sqrt(K), 1/sqrt(K)))
    bound = 1.0 / (K ** 0.5)
    weight = jax.random.uniform(kw, (OUT_N, K), minval=-bound, maxval=bound,
                                dtype=jnp.float32)
    bias = jax.random.uniform(kb, (OUT_N,), minval=-bound, maxval=bound,
                              dtype=jnp.float32)

    out = fclayer_forward(x, weight, bias)
    out = jax.block_until_ready(out)

    # pure-JAX reference check
    x3 = x.reshape(B, OUT_N, K)
    ref = jnp.einsum("bnk,nk->bn", x3, weight) + bias[None, :]
    assert out.shape == (B, OUT_N)
    assert jnp.allclose(out, ref, atol=1e-5, rtol=1e-5)

    print("KERNEL_OK")
</pallas_src>

<mosaic_0001>
module attributes {stable_mosaic.version = 11 : i64} {
  func.func @_fclayer_kernel(%arg0: i32, %arg1: memref<4x6x80xf32, #tpu.memory_space<vmem>>, %arg2: memref<6x80xf32, #tpu.memory_space<vmem>>, %arg3: memref<1x6xf32, #tpu.memory_space<vmem>>, %arg4: memref<4x6xf32, #tpu.memory_space<vmem>>) attributes {dimension_semantics = [#tpu.dimension_semantics<parallel>], iteration_bounds = array<i64: 1>, scalar_prefetch = 0 : i64, scratch_operands = 0 : i64, tpu.core_type = #tpu.core_type<tc>, window_params = [{transform_indices = @transform_0, window_bounds = array<i64: 4, 6, 80>}, {pipeline_mode = #tpu.pipeline_mode<synchronous>, transform_indices = @transform_1, window_bounds = array<i64: 6, 80>}, {pipeline_mode = #tpu.pipeline_mode<synchronous>, transform_indices = @transform_2, window_bounds = array<i64: 1, 6>}, {transform_indices = @transform_3, window_bounds = array<i64: 4, 6>}]} {
    %c0 = arith.constant 0 : index
    %c0_0 = arith.constant 0 : index
    %c0_1 = arith.constant 0 : index
    %0 = vector.load %arg1[%c0, %c0_0, %c0_1] : memref<4x6x80xf32, #tpu.memory_space<vmem>>, vector<4x6x80xf32>
    %c0_2 = arith.constant 0 : index
    %c0_3 = arith.constant 0 : index
    %1 = vector.load %arg2[%c0_2, %c0_3] : memref<6x80xf32, #tpu.memory_space<vmem>>, vector<6x80xf32>
    %2 = vector.shape_cast %1 : vector<6x80xf32> to vector<1x6x80xf32>
    %3 = vector.broadcast %2 : vector<1x6x80xf32> to vector<4x6x80xf32>
    %4 = arith.mulf %0, %3 : vector<4x6x80xf32>
    %cst = arith.constant dense<0.000000e+00> : vector<4x6xf32>
    %5 = vector.multi_reduction <add>, %4, %cst [2] : vector<4x6x80xf32> to vector<4x6xf32>
    %c0_4 = arith.constant 0 : index
    %c0_5 = arith.constant 0 : index
    %6 = vector.load %arg3[%c0_4, %c0_5] : memref<1x6xf32, #tpu.memory_space<vmem>>, vector<1x6xf32>
    %7 = vector.broadcast %6 : vector<1x6xf32> to vector<4x6xf32>
    %8 = arith.addf %5, %7 : vector<4x6xf32>
    %c0_6 = arith.constant 0 : index
    %c0_7 = arith.constant 0 : index
    %9 = vector.load %arg4[%c0_6, %c0_7] : memref<4x6xf32, #tpu.memory_space<vmem>>, vector<4x6xf32>
    tpu.vector_store %arg4[%c0_6, %c0_7], %8 {strides = array<i32>} : memref<4x6xf32, #tpu.memory_space<vmem>>, vector<4x6xf32>,
    return
  }
  func.func @transform_0(%arg0: i32) -> (i32, i32, i32) {
    %c0_i32 = arith.constant 0 : i32
    %c0_i32_0 = arith.constant 0 : i32
    %c0_i32_1 = arith.constant 0 : i32
    return %arg0, %c0_i32, %c0_i32_0 : i32, i32, i32
  }
  func.func @transform_1(%arg0: i32) -> (i32, i32) {
    %c0_i32 = arith.constant 0 : i32
    %c0_i32_0 = arith.constant 0 : i32
    %c0_i32_1 = arith.constant 0 : i32
    return %c0_i32, %c0_i32_0 : i32, i32
  }
  func.func @transform_2(%arg0: i32) -> (i32, i32) {
    %c0_i32 = arith.constant 0 : i32
    %c0_i32_0 = arith.constant 0 : i32
    %c0_i32_1 = arith.constant 0 : i32
    return %c0_i32, %c0_i32_0 : i32, i32
  }
  func.func @transform_3(%arg0: i32) -> (i32, i32) {
    %c0_i32 = arith.constant 0 : i32
    %c0_i32_0 = arith.constant 0 : i32
    return %arg0, %c0_i32 : i32, i32
  }
}

</mosaic_0001>

<llo_original>
// kernel: tpu_custom_call.1
$region0: #{tpu_custom_call.1}
  #allocation0 [shape = 'u32[]', space=smem, size = 0x4, offset = 0x4, fixed_abs, tag = 'smem constant byte address 0x4 - core index']
  #allocation1 [shape = 'u32[144,128]{1,0:T(1,128)}', space=vmem, size = 0x12000, scoped, tag = 'internal scratch']
  %s0 = inlined_call_operand.vmem [shape: f32[4,6,80], index: 0, kind: input, shape index: {}]
  %s1 = inlined_call_operand.vmem [shape: f32[6,80], index: 1, kind: input, shape index: {}]
  %s2 = inlined_call_operand.vmem [shape: f32[1,6], index: 2, kind: input, shape index: {}]
  %s3 = inlined_call_operand.hbm [shape: f32[4,6], index: 3, kind: output, shape index: {}]
  %s4 = sld [smem:[#allocation0]]
  $region22: #{tpu_custom_call.1} parent=0
    _
  %s6 = ssub.s32 1, %s4
  %s7 = scalar_select 0, %s6, %s4
  $region1: #{tpu_custom_call.1} parent=0
    #allocation2 [shape = 'u8[2048]{0}', space=vmem, size = 0x800, scoped, tag = 'output window, operand 0, single buffered']
    #allocation3 [shape = 's32[1]{0}', space=sflag, size = 0x4, scoped, tag = 'scoped memory for tpu_custom_call.1']
    %8 = vsyncpa [#allocation3], 0
    // Predicated region
    $region2: #{tpu_custom_call.1} parent=1 // pred_check
      _
    $region3: #{tpu_custom_call.1} parent=1 // pred_check_branch
      %10 = sbr.rel (0) target = $region5
    $region4: #{tpu_custom_call.1} parent=1 // pred_region
      _
    $region5: #{tpu_custom_call.1} parent=1 // pred_fallthru
      _
    // Predicated region
    $region6: #{tpu_custom_call.1} parent=1 // pred_check
      _
    $region7: #{tpu_custom_call.1} parent=1 // pred_check_branch
      %12 = sbr.rel (0) target = $region9
    $region8: #{tpu_custom_call.1} parent=1 // pred_region
      _
    $region9: #{tpu_custom_call.1} parent=1 // pred_fallthru
      _
    // Predicated region
    $region10: #{tpu_custom_call.1} parent=1 // pred_check
      _
    $region11: #{tpu_custom_call.1} parent=1 // pred_check_branch
      %14 = sbr.rel (0) target = $region13
    $region12: #{tpu_custom_call.1} parent=1 // pred_region
      _
    $region13: #{tpu_custom_call.1} parent=1 // pred_fallthru
      _
    %v15 = vld [vmem:[%s0] sm:$0x3f]
    %v16 = vld [vmem:[%s0 + $0x8] sm:$0x3f]
    %v17 = vld [vmem:[%s0 + $0x10] sm:$0x3f]
    %v18 = vld [vmem:[%s0 + $0x18] sm:$0x3f]
    %v19 = vld [vmem:[%s1] sm:$0x3f]
    %v20 = vmul.f32 %v15, %v19
    %v21 = vmul.f32 %v16, %v19
    %v22 = vmul.f32 %v17, %v19
    %v23 = vmul.f32 %v18, %v19
    %vm24 = vcmask 652288
    %v25 = vsel %vm24, %v20, 0.0
    %26 = vadd.xlane.f32.xlu0 %v25
    %v27 = vpop.xlane.xlu0 %26
    %v28 = vsel %vm24, %v21, 0.0
    %29 = vadd.xlane.f32.xlu0 %v28
    %v30 = vpop.xlane.xlu0 %29
    %v31 = vsel %vm24, %v22, 0.0
    %32 = vadd.xlane.f32.xlu0 %v31
    %v33 = vpop.xlane.xlu0 %32
    %v34 = vsel %vm24, %v23, 0.0
    %35 = vadd.xlane.f32.xlu0 %v34
    %v36 = vpop.xlane.xlu0 %35
    %v37 = vld [vmem:[%s2] sm:$0x1]
    %v39 = vlaneseq
    %v40 = vshrl.u32 %v39, 7
    %v41 = vsub.s32 0, %v40
    %v42 = vrot.slane %v37, %v41
    %44 = vbcast.lane.b32.xlu0 %v42, 256
    %v45 = vpop.permute.xlu0 %44
    %v47 = vadd.f32 %v27, %v45
    %v48 = vadd.f32 %v30, %v45
    %v49 = vadd.f32 %v33, %v45
    %v50 = vadd.f32 %v36, %v45
    %55 = vset.pattern.permute.xlu0 0
    %56 = vperm.xlu0 %55, %v47
    %v57 = vpop.permute.xlu0 %56
    %58 = vset.pattern.permute.xlu0 0
    %59 = vperm.xlu0 %58, %v48
    %v60 = vpop.permute.xlu0 %59
    %61 = vset.pattern.permute.xlu0 0
    %62 = vperm.xlu0 %61, %v49
    %v63 = vpop.permute.xlu0 %62
    %64 = vset.pattern.permute.xlu0 0
    %65 = vperm.xlu0 %64, %v50
    %v66 = vpop.permute.xlu0 %65
    %v67 = vlaneseq
    %v68 = vand.u32 %v67, 127
    %v69 = vlaneseq
    %v70 = vshrl.u32 %v69, 7
    %v71 = vsub.s32 %v68, %v70
    %v72 = vrot.slane %v57, %v71
    %v73 = vlaneseq
    %v74 = vshrl.u32 %v73, 7
    %v75 = vsub.s32 %v68, %v74
    %v76 = vrot.slane %v60, %v75
    %v77 = vlaneseq
    %v78 = vshrl.u32 %v77, 7
    %v79 = vsub.s32 %v68, %v78
    %v80 = vrot.slane %v63, %v79
    %v81 = vlaneseq
    %v82 = vshrl.u32 %v81, 7
    %v83 = vsub.s32 %v68, %v82
    %v84 = vrot.slane %v66, %v83
    %vm85 = vcmask 1041409
    %v86 = vsel %vm85, %v76, %v72
    %vm87 = vcmask 1042434
    %v88 = vsel %vm87, %v80, %v86
    %vm89 = vcmask 1043459
    %v90 = vsel %vm89, %v84, %v88
    %vm92 = vcmask 44032
    %93 = vst.msk [vmem:[#allocation2] sm:$0xf] %vm92, %v90
    // Predicated region
    $region14: #{tpu_custom_call.1} parent=1 // pred_check
      _
    $region15: #{tpu_custom_call.1} parent=1 // pred_check_branch
      %95 = sbr.rel (0) target = $region17
    $region16: #{tpu_custom_call.1} parent=1 // pred_region
      %s97 = ssub.s32 64, 64
      %98 = vsyncadd [#allocation3], %s97
      %s100 = sshll.u32 [#allocation2], 4
      %s101 = int_to_ptr.vmem [resolvable:$true] %s100
      %103 = dma.vmem_to_hbm [thread:$0]  %s101, 64, %s3, [#allocation3]
    $region17: #{tpu_custom_call.1} parent=1 // pred_fallthru
      _
    // Predicated region
    $region18: #{tpu_custom_call.1} parent=1 // pred_check
      _
    $region19: #{tpu_custom_call.1} parent=1 // pred_check_branch
      %105 = sbr.rel (0) target = $region21
    $region20: #{tpu_custom_call.1} parent=1 // pred_region
      %106 = dma.done [#allocation3], 64
    $region21: #{tpu_custom_call.1} parent=1 // pred_fallthru
      _
    %107 = vsyncpa [#allocation3], 1

</llo_original>
